<compile_context>
chip_gen: v7x
topology: tpu7x:2x2x1
jax: 0.10.0
libtpu: 0.0.40
codegen_flags: <defaults>
</compile_context>

<pallas_src>
import jax
import jax.numpy as jnp
from jax.experimental import pallas as pl
from jax.experimental.pallas import tpu as pltpu


def _prop_pos_emb_kernel(scale_ref, wb_ref, out_ref):
    # scale_ref : SMEM (1,)        f32   -> 1 / num_embeddings
    # wb_ref    : VMEM (2, emb_dim) f32  -> row 0 = W, row 1 = b
    # out_ref   : VMEM (ts, emb_dim)     -> one seq tile of the output
    ts, emb_dim = out_ref.shape
    row0 = pl.program_id(0) * ts                                   # global row offset
    rows = jax.lax.broadcasted_iota(jnp.int32, (ts, emb_dim), 0) + row0
    pos = rows.astype(jnp.float32) * scale_ref[0]                  # (ts, emb_dim)
    w = wb_ref[0:1, :]                                             # (1, emb_dim)
    b = wb_ref[1:2, :]                                             # (1, emb_dim)
    out_ref[...] = (pos * w + b).astype(out_ref.dtype)             # VPU FMA, cast on store


def _choose_row_tile(seq_len: int, emb_dim: int, itemsize: int) -> int:
    # Keep each output block <= ~8 MiB so double-buffering (+ the tiny w/b
    # block) fits comfortably under the v7x 32 MiB scoped-VMEM default.
    max_rows = max(8, (8 * 1024 * 1024) // max(1, emb_dim * itemsize))
    max_rows = max(8, (max_rows // 8) * 8)
    ts = min(seq_len, 512, max_rows)
    if ts < seq_len:
        ts = max(8, (ts // 8) * 8)      # partial-extent tiles must be 8-aligned
    return ts


def proportional_positional_embedding(inp, weight, bias, num_embeddings,
                                       out_dtype=jnp.float32):
    """
    inp            : (bsz, seq_len)  int   -- only its seq_len (shape[1]) matters
    weight         : (emb_dim, 1)   float32 (torch nn.Linear layout)
    bias           : (emb_dim,)     float32
    num_embeddings : python int
    returns        : (seq_len, emb_dim) out_dtype
    """
    seq_len = inp.shape[1]
    emb_dim = weight.shape[0]
    # Static shape check (no device sync): torch would silently truncate here.
    if seq_len > num_embeddings:
        raise ValueError(f"seq_len={seq_len} > num_embeddings={num_embeddings}")
    # TODO(synk): the torch runtime assert `(input < num_embeddings).all()` is a
    # value check with no effect on the output; do it with checkify outside the
    # hot path if needed (a blocking bool() sync here would dominate runtime).

    itemsize = jnp.dtype(out_dtype).itemsize
    ts = _choose_row_tile(seq_len, emb_dim, itemsize)
    grid = (pl.cdiv(seq_len, ts),)

    scale = jnp.full((1,), 1.0 / num_embeddings, dtype=jnp.float32)      # SMEM scalar
    wb = jnp.concatenate(
        [weight.reshape(1, emb_dim).astype(jnp.float32),
         bias.reshape(1, emb_dim).astype(jnp.float32)], axis=0)          # (2, emb_dim)

    out = pl.pallas_call(
        _prop_pos_emb_kernel,
        out_shape=jax.ShapeDtypeStruct((seq_len, emb_dim), out_dtype),
        grid=grid,
        in_specs=[
            pl.BlockSpec(memory_space=pltpu.MemorySpace.SMEM),   # scale, whole array
            pl.BlockSpec((2, emb_dim), lambda i: (0, 0)),        # w/b, fetched once
        ],
        out_specs=pl.BlockSpec((ts, emb_dim), lambda i: (i, 0)),
        compiler_params=pltpu.CompilerParams(
            dimension_semantics=("parallel",)),
        cost_estimate=pl.CostEstimate(
            flops=2 * seq_len * emb_dim,
            transcendentals=0,
            bytes_accessed=seq_len * emb_dim * itemsize + 2 * emb_dim * 4 + 4,
        ),
    )(scale, wb)
    return out


if __name__ == "__main__":
    key = jax.random.PRNGKey(0)
    k_w, k_b, k_in = jax.random.split(key, 3)

    num_embeddings = 16
    emb_dim = 128          # lane-dense output (multiple of 128)
    bsz, seq_len = 2, 8

    # Deterministic parameter init (mimics nn.Linear(1, emb_dim): fan_in == 1
    # gives a uniform(-1, 1) bound).
    weight = jax.random.uniform(k_w, (emb_dim, 1), jnp.float32, -1.0, 1.0)
    bias = jax.random.uniform(k_b, (emb_dim,), jnp.float32, -1.0, 1.0)

    # Example input (only its seq_len is consumed by the forward pass).
    inp = jax.random.randint(k_in, (bsz, seq_len), 0, num_embeddings, jnp.int32)

    out = proportional_positional_embedding(inp, weight, bias, num_embeddings)
    out = jax.block_until_ready(out)

    # Reference check in plain JAX (same math as the torch module).
    pos = (jnp.arange(num_embeddings, dtype=jnp.float32)[:, None]
           / num_embeddings)[:seq_len]                       # (seq_len, 1)
    ref = pos @ weight.T + bias[None, :]
    assert out.shape == (seq_len, emb_dim)
    assert jnp.allclose(out, ref, atol=1e-6, rtol=1e-6)

    print("KERNEL_OK")
</pallas_src>

<mosaic_0001>
module attributes {stable_mosaic.version = 11 : i64} {
  func.func @_prop_pos_emb_kernel(%arg0: i32, %arg1: memref<1xf32, #tpu.memory_space<smem>>, %arg2: memref<2x128xf32, #tpu.memory_space<vmem>>, %arg3: memref<8x128xf32, #tpu.memory_space<vmem>>) attributes {dimension_semantics = [#tpu.dimension_semantics<parallel>], iteration_bounds = array<i64: 1>, scalar_prefetch = 0 : i64, scratch_operands = 0 : i64, tpu.core_type = #tpu.core_type<tc>, window_params = [{transform_indices = @transform_0, window_bounds = array<i64: 1>}, {pipeline_mode = #tpu.pipeline_mode<synchronous>, transform_indices = @transform_1, window_bounds = array<i64: 2, 128>}, {transform_indices = @transform_2, window_bounds = array<i64: 8, 128>}]} {
    %c8_i32 = arith.constant 8 : i32
    %0 = arith.muli %arg0, %c8_i32 : i32
    %1 = tpu.iota {dimensions = array<i32: 0>} : vector<8x128xi32>
    %2 = vector.broadcast %0 : i32 to vector<8x128xi32>
    %3 = arith.addi %1, %2 : vector<8x128xi32>
    %4 = arith.sitofp %3 : vector<8x128xi32> to vector<8x128xf32>
    %c0 = arith.constant 0 : index
    %5 = memref.load %arg1[%c0] : memref<1xf32, #tpu.memory_space<smem>>
    %6 = vector.broadcast %5 : f32 to vector<8x128xf32>
    %7 = arith.mulf %4, %6 : vector<8x128xf32>
    %c0_0 = arith.constant 0 : index
    %c0_1 = arith.constant 0 : index
    %8 = vector.load %arg2[%c0_0, %c0_1] : memref<2x128xf32, #tpu.memory_space<vmem>>, vector<1x128xf32>
    %c1 = arith.constant 1 : index
    %c0_2 = arith.constant 0 : index
    %9 = vector.load %arg2[%c1, %c0_2] : memref<2x128xf32, #tpu.memory_space<vmem>>, vector<1x128xf32>
    %10 = vector.broadcast %8 : vector<1x128xf32> to vector<8x128xf32>
    %11 = arith.mulf %7, %10 : vector<8x128xf32>
    %12 = vector.broadcast %9 : vector<1x128xf32> to vector<8x128xf32>
    %13 = arith.addf %11, %12 : vector<8x128xf32>
    %c0_3 = arith.constant 0 : index
    %c0_4 = arith.constant 0 : index
    %14 = vector.load %arg3[%c0_3, %c0_4] : memref<8x128xf32, #tpu.memory_space<vmem>>, vector<8x128xf32>
    tpu.vector_store %arg3[%c0_3, %c0_4], %13 {strides = array<i32>} : memref<8x128xf32, #tpu.memory_space<vmem>>, vector<8x128xf32>,
    return
  }
  func.func @transform_0(%arg0: i32) -> i32 {
    %c0_i32 = arith.constant 0 : i32
    %c0_i32_0 = arith.constant 0 : i32
    return %c0_i32 : i32
  }
  func.func @transform_1(%arg0: i32) -> (i32, i32) {
    %c0_i32 = arith.constant 0 : i32
    %c0_i32_0 = arith.constant 0 : i32
    %c0_i32_1 = arith.constant 0 : i32
    return %c0_i32, %c0_i32_0 : i32, i32
  }
  func.func @transform_2(%arg0: i32) -> (i32, i32) {
    %c0_i32 = arith.constant 0 : i32
    %c0_i32_0 = arith.constant 0 : i32
    return %arg0, %c0_i32 : i32, i32
  }
}

</mosaic_0001>

<llo_original>
// kernel: tpu_custom_call.1
$region0: #{tpu_custom_call.1}
  #allocation0 [shape = 'u32[]', space=smem, size = 0x4, offset = 0x4, fixed_abs, tag = 'smem constant byte address 0x4 - core index']
  #allocation1 [shape = 'u32[144,128]{1,0:T(1,128)}', space=vmem, size = 0x12000, scoped, tag = 'internal scratch']
  #allocation2 [shape = 'f32[1]{0:T(128)S(6)}', space=smem, size = 0x200, scoped, tag = 'scoped memory for tpu_custom_call.1']
  %s0 = inlined_call_operand.<no memory space> [shape: f32[1], index: 0, kind: input, shape index: {}]
  %s1 = inlined_call_operand.vmem [shape: f32[2,128], index: 1, kind: input, shape index: {}]
  %s2 = inlined_call_operand.hbm [shape: f32[8,128], index: 2, kind: output, shape index: {}]
  %s3 = sld [smem:[#allocation0]]
  $region18: #{tpu_custom_call.1} parent=0
    _
  %s5 = ssub.s32 1, %s3
  %s6 = scalar_select 0, %s5, %s3
  %7 = sst [smem:[#allocation2]] %s0
  $region1: #{tpu_custom_call.1} parent=0
    #allocation3 [shape = 'u8[4096]{0}', space=vmem, size = 0x1000, scoped, tag = 'output window, operand 0, single buffered']
    #allocation4 [shape = 's32[1]{0}', space=sflag, size = 0x4, scoped, tag = 'scoped memory for tpu_custom_call.1']
    %8 = vsyncpa [#allocation4], 0
    // Predicated region
    $region2: #{tpu_custom_call.1} parent=1 // pred_check
      _
    $region3: #{tpu_custom_call.1} parent=1 // pred_check_branch
      %10 = sbr.rel (0) target = $region5
    $region4: #{tpu_custom_call.1} parent=1 // pred_region
      _
    $region5: #{tpu_custom_call.1} parent=1 // pred_fallthru
      _
    // Predicated region
    $region6: #{tpu_custom_call.1} parent=1 // pred_check
      _
    $region7: #{tpu_custom_call.1} parent=1 // pred_check_branch
      %12 = sbr.rel (0) target = $region9
    $region8: #{tpu_custom_call.1} parent=1 // pred_region
      _
    $region9: #{tpu_custom_call.1} parent=1 // pred_fallthru
      _
    %s13 = smul.u32 0, 8
    %v14 = vlaneseq
    %v15 = vshrl.u32 %v14, 7
    %v16 = vstv %s13
    %v17 = vadd.s32 %v15, %v16
    %v18 = vcvt.s32.f32 %v17
    %s19 = sld [smem:[#allocation2]]
    %v20 = vstv %s19
    %v21 = vmul.f32 %v18, %v20
    %v22 = vld [vmem:[%s1] sm:$0x1]
    %v23 = vld [vmem:[%s1 + $0x1] sm:$0x1]
    %v24 = vlaneseq
    %v25 = vshrl.u32 %v24, 7
    %v26 = vsub.s32 0, %v25
    %v27 = vrot.slane %v22, %v26
    %v28 = vmul.f32 %v21, %v27
    %v29 = vlaneseq
    %v30 = vshrl.u32 %v29, 7
    %v31 = vsub.s32 0, %v30
    %v32 = vrot.slane %v23, %v31
    %v33 = vadd.f32 %v28, %v32
    %34 = vst [vmem:[#allocation3] sm:$0xff] %v33
    // Predicated region
    $region10: #{tpu_custom_call.1} parent=1 // pred_check
      _
    $region11: #{tpu_custom_call.1} parent=1 // pred_check_branch
      %36 = sbr.rel (0) target = $region13
    $region12: #{tpu_custom_call.1} parent=1 // pred_region
      %s38 = ssub.s32 128, 128
      %39 = vsyncadd [#allocation4], %s38
      %s41 = sshll.u32 [#allocation3], 4
      %s42 = int_to_ptr.vmem [resolvable:$true] %s41
      %44 = dma.vmem_to_hbm [thread:$0]  %s42, 128, %s2, [#allocation4]
    $region13: #{tpu_custom_call.1} parent=1 // pred_fallthru
      _
    // Predicated region
    $region14: #{tpu_custom_call.1} parent=1 // pred_check
      _
    $region15: #{tpu_custom_call.1} parent=1 // pred_check_branch
      %46 = sbr.rel (0) target = $region17
    $region16: #{tpu_custom_call.1} parent=1 // pred_region
      %47 = dma.done [#allocation4], 128
    $region17: #{tpu_custom_call.1} parent=1 // pred_fallthru
      _
    %48 = vsyncpa [#allocation4], 1

</llo_original>
